<compile_context>
chip_gen: v5e
topology: v5e:2x2
jax: 0.10.0
libtpu: 0.0.40
codegen_flags: <defaults>
</compile_context>

<pallas_src>
import functools

import jax
import jax.numpy as jnp
from jax.experimental import pallas as pl
from jax.experimental.pallas import tpu as pltpu


def _feature_attention_kernel(x_ref, w1_ref, b1_ref, w2_ref,
                              wf_ref, aw_ref, *, scale_factor):
    x = x_ref[...].astype(jnp.float32)                       # (tb, D)

    # First Linear + tanh: MXU matmul (f32 accumulate) + EUP tanh.
    h = jnp.tanh(
        jnp.dot(x, w1_ref[...], preferred_element_type=jnp.float32)
        + b1_ref[...]                                         # (1, A) broadcast
    )                                                         # (tb, A)

    # Second Linear (N=1, no bias) as VPU multiply + lane reduction instead of
    # a one-column MXU matmul.
    s = jnp.sum(h * w2_ref[...], axis=-1, keepdims=True)      # (tb, 1)

    aw = jax.nn.sigmoid(s) * scale_factor                     # (tb, 1)
    wf_ref[...] = (x * (1.0 + aw)).astype(wf_ref.dtype)
    aw_ref[...] = aw.astype(aw_ref.dtype)


def _round_up(v, m):
    return ((v + m - 1) // m) * m


def feature_attention(x, w1, b1, w2, *, scale_factor=0.1,
                      max_rows_per_step=1024):
    """x: (B, D). w1: (D, A), b1: (A,), w2: (A, 1) (pre-transposed Linear
    weights so the kernel computes plain x @ W). Returns (wf, aw)."""
    B, D = x.shape
    A = w1.shape[1]

    # Row tile: one big block when the batch fits in a single step, otherwise
    # large tiles (multiple of 8 sublanes). Ragged batches are zero-padded.
    tb = min(_round_up(B, 8), _round_up(max_rows_per_step, 8))
    num_steps = pl.cdiv(B, tb)
    B_pad = num_steps * tb
    x_in = jnp.pad(x, ((0, B_pad - B), (0, 0))) if B_pad != B else x

    b1_2d = b1.reshape(1, A)
    w2_row = w2.reshape(1, A)

    kernel = functools.partial(_feature_attention_kernel,
                               scale_factor=float(scale_factor))

    grid_spec = pltpu.PrefetchScalarGridSpec(
        num_scalar_prefetch=0,
        grid=(num_steps,),
        in_specs=[
            pl.BlockSpec((tb, D), lambda i: (i, 0)),   # x row tile
            pl.BlockSpec((D, A), lambda i: (0, 0)),    # W1 (resident)
            pl.BlockSpec((1, A), lambda i: (0, 0)),    # b1 (resident)
            pl.BlockSpec((1, A), lambda i: (0, 0)),    # w2 row (resident)
        ],
        out_specs=[
            pl.BlockSpec((tb, D), lambda i: (i, 0)),   # weighted features
            pl.BlockSpec((tb, 1), lambda i: (i, 0)),   # attention weights
        ],
    )

    # With a single grid step there is nothing to shard across cores; only use
    # "parallel" when there are several sizeable row tiles.
    sem = ("arbitrary",) if num_steps == 1 else ("parallel",)

    wf, aw = pl.pallas_call(
        kernel,
        grid_spec=grid_spec,
        out_shape=(
            jax.ShapeDtypeStruct((B_pad, D), x.dtype),
            jax.ShapeDtypeStruct((B_pad, 1), x.dtype),
        ),
        compiler_params=pltpu.CompilerParams(dimension_semantics=sem),
    )(x_in, w1, b1_2d, w2_row)

    if B_pad != B:
        wf = wf[:B]
        aw = aw[:B]
    return wf, aw


def feature_attention_ref(x, w1, b1, w2, scale_factor=0.1):
    h = jnp.tanh(x @ w1 + b1)
    aw = jax.nn.sigmoid(h @ w2) * scale_factor
    return x * (1.0 + aw), aw


if __name__ == "__main__":
    # Small deterministic shapes consistent with the module:
    # batch=64, input_dim=32, attention_dim = input_dim // 2 = 16.
    B, D = 64, 32
    A = D // 2
    scale_factor = 0.1

    key = jax.random.PRNGKey(0)
    kx, kw1, kb1, kw2 = jax.random.split(key, 4)

    x = jax.random.normal(kx, (B, D), dtype=jnp.float32)
    # Deterministic synthetic parameters (not a checkpoint load).
    w1 = jax.random.normal(kw1, (D, A), dtype=jnp.float32) * 0.1
    b1 = jax.random.normal(kb1, (A,), dtype=jnp.float32) * 0.1
    w2 = jax.random.normal(kw2, (A, 1), dtype=jnp.float32) * 0.1

    wf, aw = feature_attention(x, w1, b1, w2, scale_factor=scale_factor)
    jax.block_until_ready((wf, aw))

    wf_ref, aw_ref = feature_attention_ref(x, w1, b1, w2, scale_factor)
    assert jnp.allclose(wf, wf_ref, atol=1e-5, rtol=1e-5)
    assert jnp.allclose(aw, aw_ref, atol=1e-5, rtol=1e-5)

    # Also exercise a ragged batch (not a multiple of the row tile).
    xr = jax.random.normal(kx, (37, D), dtype=jnp.float32)
    wfr, awr = feature_attention(xr, w1, b1, w2, scale_factor=scale_factor)
    jax.block_until_ready((wfr, awr))
    wfr_ref, awr_ref = feature_attention_ref(xr, w1, b1, w2, scale_factor)
    assert jnp.allclose(wfr, wfr_ref, atol=1e-5, rtol=1e-5)
    assert jnp.allclose(awr, awr_ref, atol=1e-5, rtol=1e-5)

    print("KERNEL_OK")
</pallas_src>

<mosaic_0001>
module attributes {stable_mosaic.version = 11 : i64} {
  func.func @_feature_attention_kernel(%arg0: i32, %arg1: memref<64x32xf32, #tpu.memory_space<vmem>>, %arg2: memref<32x16xf32, #tpu.memory_space<vmem>>, %arg3: memref<1x16xf32, #tpu.memory_space<vmem>>, %arg4: memref<1x16xf32, #tpu.memory_space<vmem>>, %arg5: memref<64x32xf32, #tpu.memory_space<vmem>>, %arg6: memref<64x1xf32, #tpu.memory_space<vmem>>) attributes {dimension_semantics = [#tpu.dimension_semantics<arbitrary>], iteration_bounds = array<i64: 1>, scalar_prefetch = 0 : i64, scratch_operands = 0 : i64, tpu.core_type = #tpu.core_type<tc>, window_params = [{transform_indices = @transform_0, window_bounds = array<i64: 64, 32>}, {pipeline_mode = #tpu.pipeline_mode<synchronous>, transform_indices = @transform_1, window_bounds = array<i64: 32, 16>}, {pipeline_mode = #tpu.pipeline_mode<synchronous>, transform_indices = @transform_2, window_bounds = array<i64: 1, 16>}, {pipeline_mode = #tpu.pipeline_mode<synchronous>, transform_indices = @transform_3, window_bounds = array<i64: 1, 16>}, {transform_indices = @transform_4, window_bounds = array<i64: 64, 32>}, {transform_indices = @transform_5, window_bounds = array<i64: 64, 1>}]} {
    %c0 = arith.constant 0 : index
    %c0_0 = arith.constant 0 : index
    %0 = vector.load %arg1[%c0, %c0_0] : memref<64x32xf32, #tpu.memory_space<vmem>>, vector<64x32xf32>
    %c0_1 = arith.constant 0 : index
    %c0_2 = arith.constant 0 : index
    %1 = vector.load %arg2[%c0_1, %c0_2] : memref<32x16xf32, #tpu.memory_space<vmem>>, vector<32x16xf32>
    %cst = arith.constant dense<0.000000e+00> : vector<64x16xf32>
    %2 = tpu.matmul %0, %1, %cst {dimension_numbers = #tpu.dot_dimension_numbers<[1], [0], [0], [1], [0, 0, 1, 1], [], []>} : vector<64x32xf32>, vector<32x16xf32>, vector<64x16xf32> -> vector<64x16xf32>
    %c0_3 = arith.constant 0 : index
    %c0_4 = arith.constant 0 : index
    %3 = vector.load %arg3[%c0_3, %c0_4] : memref<1x16xf32, #tpu.memory_space<vmem>>, vector<1x16xf32>
    %4 = vector.broadcast %3 : vector<1x16xf32> to vector<64x16xf32>
    %5 = arith.addf %2, %4 : vector<64x16xf32>
    %6 = math.tanh %5 : vector<64x16xf32>
    %c0_5 = arith.constant 0 : index
    %c0_6 = arith.constant 0 : index
    %7 = vector.load %arg4[%c0_5, %c0_6] : memref<1x16xf32, #tpu.memory_space<vmem>>, vector<1x16xf32>
    %8 = vector.broadcast %7 : vector<1x16xf32> to vector<64x16xf32>
    %9 = arith.mulf %6, %8 : vector<64x16xf32>
    %cst_7 = arith.constant dense<0.000000e+00> : vector<64xf32>
    %10 = vector.multi_reduction <add>, %9, %cst_7 [1] : vector<64x16xf32> to vector<64xf32>
    %11 = vector.shape_cast %10 : vector<64xf32> to vector<64x1xf32>
    %12 = arith.negf %11 : vector<64x1xf32>
    %13 = math.exp %12 : vector<64x1xf32>
    %cst_8 = arith.constant 1.000000e+00 : f32
    %14 = vector.broadcast %cst_8 : f32 to vector<64x1xf32>
    %15 = arith.addf %14, %13 : vector<64x1xf32>
    %16 = arith.divf %14, %15 : vector<64x1xf32>
    %cst_9 = arith.constant 1.000000e-01 : f32
    %17 = vector.broadcast %cst_9 : f32 to vector<64x1xf32>
    %18 = arith.mulf %16, %17 : vector<64x1xf32>
    %cst_10 = arith.constant 1.000000e+00 : f32
    %19 = vector.broadcast %cst_10 : f32 to vector<64x1xf32>
    %20 = arith.addf %19, %18 : vector<64x1xf32>
    %21 = vector.broadcast %20 : vector<64x1xf32> to vector<64x32xf32>
    %22 = arith.mulf %0, %21 : vector<64x32xf32>
    %c0_11 = arith.constant 0 : index
    %c0_12 = arith.constant 0 : index
    %23 = vector.load %arg5[%c0_11, %c0_12] : memref<64x32xf32, #tpu.memory_space<vmem>>, vector<64x32xf32>
    tpu.vector_store %arg5[%c0_11, %c0_12], %22 {strides = array<i32>} : memref<64x32xf32, #tpu.memory_space<vmem>>, vector<64x32xf32>,
    %c0_13 = arith.constant 0 : index
    %c0_14 = arith.constant 0 : index
    %24 = vector.load %arg6[%c0_13, %c0_14] : memref<64x1xf32, #tpu.memory_space<vmem>>, vector<64x1xf32>
    tpu.vector_store %arg6[%c0_13, %c0_14], %18 {strides = array<i32>} : memref<64x1xf32, #tpu.memory_space<vmem>>, vector<64x1xf32>,
    return
  }
  func.func @transform_0(%arg0: i32) -> (i32, i32) {
    %c0_i32 = arith.constant 0 : i32
    %c0_i32_0 = arith.constant 0 : i32
    return %arg0, %c0_i32 : i32, i32
  }
  func.func @transform_1(%arg0: i32) -> (i32, i32) {
    %c0_i32 = arith.constant 0 : i32
    %c0_i32_0 = arith.constant 0 : i32
    %c0_i32_1 = arith.constant 0 : i32
    return %c0_i32, %c0_i32_0 : i32, i32
  }
  func.func @transform_2(%arg0: i32) -> (i32, i32) {
    %c0_i32 = arith.constant 0 : i32
    %c0_i32_0 = arith.constant 0 : i32
    %c0_i32_1 = arith.constant 0 : i32
    return %c0_i32, %c0_i32_0 : i32, i32
  }
  func.func @transform_3(%arg0: i32) -> (i32, i32) {
    %c0_i32 = arith.constant 0 : i32
    %c0_i32_0 = arith.constant 0 : i32
    %c0_i32_1 = arith.constant 0 : i32
    return %c0_i32, %c0_i32_0 : i32, i32
  }
  func.func @transform_4(%arg0: i32) -> (i32, i32) {
    %c0_i32 = arith.constant 0 : i32
    %c0_i32_0 = arith.constant 0 : i32
    return %arg0, %c0_i32 : i32, i32
  }
  func.func @transform_5(%arg0: i32) -> (i32, i32) {
    %c0_i32 = arith.constant 0 : i32
    %c0_i32_0 = arith.constant 0 : i32
    return %arg0, %c0_i32 : i32, i32
  }
}

</mosaic_0001>

<llo_original>
// kernel: tpu_custom_call.1
$region0: #{tpu_custom_call.1}
  #allocation0 [shape = 'u32[]', space=smem, size = 0x4, offset = 0x4, fixed_abs, tag = 'smem constant byte address 0x4 - core index']
  #allocation1 [shape = 'u32[72,128]{1,0:T(1,128)}', space=vmem, size = 0x9000, scoped, tag = 'internal scratch']
  %s0 = inlined_call_operand.vmem [shape: f32[64,32], index: 0, kind: input, shape index: {}]
  %s1 = inlined_call_operand.vmem [shape: f32[32,16], index: 1, kind: input, shape index: {}]
  %s2 = inlined_call_operand.vmem [shape: f32[1,16], index: 2, kind: input, shape index: {}]
  %s3 = inlined_call_operand.vmem [shape: f32[1,16], index: 3, kind: input, shape index: {}]
  %s4 = inlined_call_operand.vmem [shape: f32[64,32], index: 4, kind: output, shape index: {0}]
  %s5 = inlined_call_operand.vmem [shape: f32[64,1], index: 5, kind: output, shape index: {1}]
  %6 = xla_tuple %s4, %s5
  %s7 = sld [smem:[#allocation0]]
  $region34: #{tpu_custom_call.1} parent=0
    _
  %s9 = ssub.s32 1, %s7
  %s10 = scalar_select 0, %s9, %s7
  // Predicated region
  $region2: #{tpu_custom_call.1} parent=0 // pred_check
    _
  $region3: #{tpu_custom_call.1} parent=0 // pred_check_branch
    %12 = sbr.rel (0) target = $region5
  $region4: #{tpu_custom_call.1} parent=0 // pred_region
    _
  $region5: #{tpu_custom_call.1} parent=0 // pred_fallthru
    _
  // Predicated region
  $region6: #{tpu_custom_call.1} parent=0 // pred_check
    _
  $region7: #{tpu_custom_call.1} parent=0 // pred_check_branch
    %14 = sbr.rel (0) target = $region9
  $region8: #{tpu_custom_call.1} parent=0 // pred_region
    _
  $region9: #{tpu_custom_call.1} parent=0 // pred_fallthru
    _
  // Predicated region
  $region10: #{tpu_custom_call.1} parent=0 // pred_check
    _
  $region11: #{tpu_custom_call.1} parent=0 // pred_check_branch
    %16 = sbr.rel (0) target = $region13
  $region12: #{tpu_custom_call.1} parent=0 // pred_region
    _
  $region13: #{tpu_custom_call.1} parent=0 // pred_fallthru
    _
  // Predicated region
  $region14: #{tpu_custom_call.1} parent=0 // pred_check
    _
  $region15: #{tpu_custom_call.1} parent=0 // pred_check_branch
    %18 = sbr.rel (0) target = $region17
  $region16: #{tpu_custom_call.1} parent=0 // pred_region
    _
  $region17: #{tpu_custom_call.1} parent=0 // pred_fallthru
    _
  %v19 = vld [vmem:[%s0] sm:$0xff]
  %v20 = vld [vmem:[%s0 + $0x8] sm:$0xff]
  %v21 = vld [vmem:[%s0 + $0x10] sm:$0xff]
  %v22 = vld [vmem:[%s0 + $0x18] sm:$0xff]
  %v23 = vld [vmem:[%s0 + $0x20] sm:$0xff]
  %v24 = vld [vmem:[%s0 + $0x28] sm:$0xff]
  %v25 = vld [vmem:[%s0 + $0x30] sm:$0xff]
  %v26 = vld [vmem:[%s0 + $0x38] sm:$0xff]
  %v27 = vld [vmem:[%s1] sm:$0xff]
  %v28 = vld [vmem:[%s1 + $0x8] sm:$0xff]
  %v29 = vld [vmem:[%s1 + $0x10] sm:$0xff]
  %v30 = vld [vmem:[%s1 + $0x18] sm:$0xff]
  %v31 = vld [vmem:[%s2] sm:$0x1]
  %v33 = vperm.slane %v31, 0
  %vm35 = vcmask 261120
  %v37 = vsel %vm35, %v19, 0
  %v40 = vsel %vm35, %v20, 0
  %v43 = vsel %vm35, %v21, 0
  %v46 = vsel %vm35, %v22, 0
  %v49 = vsel %vm35, %v23, 0
  %v52 = vsel %vm35, %v24, 0
  %v55 = vsel %vm35, %v25, 0
  %v58 = vsel %vm35, %v26, 0
  %60 = vmatpush.msra.mxu0 0.0
  %61 = vmatpush.msra.mxu0 0.0
  %62 = vmatpush.msra.mxu0 0.0
  %63 = vmatpush.msra.mxu0 0.0
  %64 = vmatpush.msra.mxu0 0.0
  %65 = vmatpush.msra.mxu0 0.0
  %66 = vmatpush.msra.mxu0 0.0
  %67 = vmatpush.msra.mxu0 0.0
  %68 = vmatpush.msra.mxu0 0.0
  %69 = vmatpush.msra.mxu0 0.0
  %70 = vmatpush.msra.mxu0 0.0
  %71 = vmatpush.msra.mxu0 0.0
  %72 = vmatpush.msra.mxu0 %v30
  %73 = vmatpush.msra.mxu0 %v29
  %74 = vmatpush.msra.mxu0 %v28
  %75 = vmatpush.msra.mxu0 %v27
  %76 = vmatmul.f32.gmra.mxu0 %v37
  %v77 = vpop.f32.mrf.mxu0
  %v78 = vadd.f32 %v33, %v77
  %79 = vmatmul.f32.gmra.mxu0 %v40
  %v80 = vpop.f32.mrf.mxu0
  %v81 = vadd.f32 %v33, %v80
  %82 = vmatmul.f32.gmra.mxu0 %v43
  %v83 = vpop.f32.mrf.mxu0
  %v84 = vadd.f32 %v33, %v83
  %85 = vmatmul.f32.gmra.mxu0 %v46
  %v86 = vpop.f32.mrf.mxu0
  %v87 = vadd.f32 %v33, %v86
  %88 = vmatmul.f32.gmra.mxu0 %v49
  %v89 = vpop.f32.mrf.mxu0
  %v90 = vadd.f32 %v33, %v89
  %91 = vmatmul.f32.gmra.mxu0 %v52
  %v92 = vpop.f32.mrf.mxu0
  %v93 = vadd.f32 %v33, %v92
  %94 = vmatmul.f32.gmra.mxu0 %v55
  %v95 = vpop.f32.mrf.mxu0
  %v96 = vadd.f32 %v33, %v95
  %97 = vmatmul.f32.gmra.mxu0 %v58
  %v98 = vpop.f32.mrf.mxu0
  %v99 = vadd.f32 %v33, %v98
  %100 = vdwg.mxu0
  %v101 = vtanh.pop %v78
  %v102 = vtanh.pop %v81
  %v103 = vtanh.pop %v84
  %v104 = vtanh.pop %v87
  %v105 = vtanh.pop %v90
  %v106 = vtanh.pop %v93
  %v107 = vtanh.pop %v96
  %v108 = vtanh.pop %v99
  %v109 = vld [vmem:[%s3] sm:$0x1]
  %v111 = vperm.slane %v109, 0
  %v113 = vmul.f32 %v101, %v111
  %v114 = vmul.f32 %v102, %v111
  %v115 = vmul.f32 %v103, %v111
  %v116 = vmul.f32 %v104, %v111
  %v117 = vmul.f32 %v105, %v111
  %v118 = vmul.f32 %v106, %v111
  %v119 = vmul.f32 %v107, %v111
  %v120 = vmul.f32 %v108, %v111
  %vm121 = vcmask 130048
  %v122 = vsel %vm121, %v113, 0.0
  %123 = vadd.xlane.f32.xlu0 %v122
  %v124 = vpop.xlane.xlu0 %123
  %v125 = vsel %vm121, %v114, 0.0
  %126 = vadd.xlane.f32.xlu0 %v125
  %v127 = vpop.xlane.xlu0 %126
  %v128 = vsel %vm121, %v115, 0.0
  %129 = vadd.xlane.f32.xlu0 %v128
  %v130 = vpop.xlane.xlu0 %129
  %v131 = vsel %vm121, %v116, 0.0
  %132 = vadd.xlane.f32.xlu0 %v131
  %v133 = vpop.xlane.xlu0 %132
  %v134 = vsel %vm121, %v117, 0.0
  %135 = vadd.xlane.f32.xlu0 %v134
  %v136 = vpop.xlane.xlu0 %135
  %v137 = vsel %vm121, %v118, 0.0
  %138 = vadd.xlane.f32.xlu0 %v137
  %v139 = vpop.xlane.xlu0 %138
  %v140 = vsel %vm121, %v119, 0.0
  %141 = vadd.xlane.f32.xlu0 %v140
  %v142 = vpop.xlane.xlu0 %141
  %v143 = vsel %vm121, %v120, 0.0
  %144 = vadd.xlane.f32.xlu0 %v143
  %v145 = vpop.xlane.xlu0 %144
  %v146 = vxor.u32 %v124, 2147483648
  %v147 = vxor.u32 %v127, 2147483648
  %v148 = vxor.u32 %v130, 2147483648
  %v149 = vxor.u32 %v133, 2147483648
  %v150 = vxor.u32 %v136, 2147483648
  %v151 = vxor.u32 %v139, 2147483648
  %v152 = vxor.u32 %v142, 2147483648
  %v153 = vxor.u32 %v145, 2147483648
  %v154 = vmul.f32 %v146, 1.442695
  %v155 = vpow.pop %v154
  %v156 = vmul.f32 %v147, 1.442695
  %v157 = vpow.pop %v156
  %v158 = vmul.f32 %v148, 1.442695
  %v159 = vpow.pop %v158
  %v160 = vmul.f32 %v149, 1.442695
  %v161 = vpow.pop %v160
  %v162 = vmul.f32 %v150, 1.442695
  %v163 = vpow.pop %v162
  %v164 = vmul.f32 %v151, 1.442695
  %v165 = vpow.pop %v164
  %v166 = vmul.f32 %v152, 1.442695
  %v167 = vpow.pop %v166
  %v168 = vmul.f32 %v153, 1.442695
  %v169 = vpow.pop %v168
  %v170 = vadd.f32 %v155, 1.0
  %v171 = vadd.f32 %v157, 1.0
  %v172 = vadd.f32 %v159, 1.0
  %v173 = vadd.f32 %v161, 1.0
  %v174 = vadd.f32 %v163, 1.0
  %v175 = vadd.f32 %v165, 1.0
  %v176 = vadd.f32 %v167, 1.0
  %v177 = vadd.f32 %v169, 1.0
  %v178 = vrcp.pop %v170
  %v179 = vmul.f32 %v170, %v178
  %v180 = vsub.f32 1.0, %v179
  %v181 = vmul.f32 %v178, %v180
  %v182 = vadd.f32 %v178, %v181
  %vm183 = vweird.f32 %v170
  %vm184 = vweird.f32 %v178
  %vm185 = vmor %vm183, %vm184
  %v186 = vsel %vm185, %v178, %v182
  %v187 = vand.u32 2147483647, %v170
  %vm188 = vcmp.eq.f32.partialorder %v187, 8.507059e+37
  %v189 = vand.u32 %v170, 2147483648
  %v190 = vor.u32 1.1754944e-38, %v189
  %v191 = vsel %vm188, %v190, %v186
  %v192 = vmul.f32 1.0, %v191
  %v193 = vrcp.pop %v171
  %v194 = vmul.f32 %v171, %v193
  %v195 = vsub.f32 1.0, %v194
  %v196 = vmul.f32 %v193, %v195
  %v197 = vadd.f32 %v193, %v196
  %vm198 = vweird.f32 %v171
  %vm199 = vweird.f32 %v193
  %vm200 = vmor %vm198, %vm199
  %v201 = vsel %vm200, %v193, %v197
  %v202 = vand.u32 2147483647, %v171
  %vm203 = vcmp.eq.f32.partialorder %v202, 8.507059e+37
  %v204 = vand.u32 %v171, 2147483648
  %v205 = vor.u32 1.1754944e-38, %v204
  %v206 = vsel %vm203, %v205, %v201
  %v207 = vmul.f32 1.0, %v206
  %v208 = vrcp.pop %v172
  %v209 = vmul.f32 %v172, %v208
  %v210 = vsub.f32 1.0, %v209
  %v211 = vmul.f32 %v208, %v210
  %v212 = vadd.f32 %v208, %v211
  %vm213 = vweird.f32 %v172
  %vm214 = vweird.f32 %v208
  %vm215 = vmor %vm213, %vm214
  %v216 = vsel %vm215, %v208, %v212
  %v217 = vand.u32 2147483647, %v172
  %vm218 = vcmp.eq.f32.partialorder %v217, 8.507059e+37
  %v219 = vand.u32 %v172, 2147483648
  %v220 = vor.u32 1.1754944e-38, %v219
  %v221 = vsel %vm218, %v220, %v216
  %v222 = vmul.f32 1.0, %v221
  %v223 = vrcp.pop %v173
  %v224 = vmul.f32 %v173, %v223
  %v225 = vsub.f32 1.0, %v224
  %v226 = vmul.f32 %v223, %v225
  %v227 = vadd.f32 %v223, %v226
  %vm228 = vweird.f32 %v173
  %vm229 = vweird.f32 %v223
  %vm230 = vmor %vm228, %vm229
  %v231 = vsel %vm230, %v223, %v227
  %v232 = vand.u32 2147483647, %v173
  %vm233 = vcmp.eq.f32.partialorder %v232, 8.507059e+37
  %v234 = vand.u32 %v173, 2147483648
  %v235 = vor.u32 1.1754944e-38, %v234
  %v236 = vsel %vm233, %v235, %v231
  %v237 = vmul.f32 1.0, %v236
  %v238 = vrcp.pop %v174
  %v239 = vmul.f32 %v174, %v238
  %v240 = vsub.f32 1.0, %v239
  %v241 = vmul.f32 %v238, %v240
  %v242 = vadd.f32 %v238, %v241
  %vm243 = vweird.f32 %v174
  %vm244 = vweird.f32 %v238
  %vm245 = vmor %vm243, %vm244
  %v246 = vsel %vm245, %v238, %v242
  %v247 = vand.u32 2147483647, %v174
  %vm248 = vcmp.eq.f32.partialorder %v247, 8.507059e+37
  %v249 = vand.u32 %v174, 2147483648
  %v250 = vor.u32 1.1754944e-38, %v249
  %v251 = vsel %vm248, %v250, %v246
  %v252 = vmul.f32 1.0, %v251
  %v253 = vrcp.pop %v175
  %v254 = vmul.f32 %v175, %v253
  %v255 = vsub.f32 1.0, %v254
  %v256 = vmul.f32 %v253, %v255
  %v257 = vadd.f32 %v253, %v256
  %vm258 = vweird.f32 %v175
  %vm259 = vweird.f32 %v253
  %vm260 = vmor %vm258, %vm259
  %v261 = vsel %vm260, %v253, %v257
  %v262 = vand.u32 2147483647, %v175
  %vm263 = vcmp.eq.f32.partialorder %v262, 8.507059e+37
  %v264 = vand.u32 %v175, 2147483648
  %v265 = vor.u32 1.1754944e-38, %v264
  %v266 = vsel %vm263, %v265, %v261
  %v267 = vmul.f32 1.0, %v266
  %v268 = vrcp.pop %v176
  %v269 = vmul.f32 %v176, %v268
  %v270 = vsub.f32 1.0, %v269
  %v271 = vmul.f32 %v268, %v270
  %v272 = vadd.f32 %v268, %v271
  %vm273 = vweird.f32 %v176
  %vm274 = vweird.f32 %v268
  %vm275 = vmor %vm273, %vm274
  %v276 = vsel %vm275, %v268, %v272
  %v277 = vand.u32 2147483647, %v176
  %vm278 = vcmp.eq.f32.partialorder %v277, 8.507059e+37
  %v279 = vand.u32 %v176, 2147483648
  %v280 = vor.u32 1.1754944e-38, %v279
  %v281 = vsel %vm278, %v280, %v276
  %v282 = vmul.f32 1.0, %v281
  %v283 = vrcp.pop %v177
  %v284 = vmul.f32 %v177, %v283
  %v285 = vsub.f32 1.0, %v284
  %v286 = vmul.f32 %v283, %v285
  %v287 = vadd.f32 %v283, %v286
  %vm288 = vweird.f32 %v177
  %vm289 = vweird.f32 %v283
  %vm290 = vmor %vm288, %vm289
  %v291 = vsel %vm290, %v283, %v287
  %v292 = vand.u32 2147483647, %v177
  %vm293 = vcmp.eq.f32.partialorder %v292, 8.507059e+37
  %v294 = vand.u32 %v177, 2147483648
  %v295 = vor.u32 1.1754944e-38, %v294
  %v296 = vsel %vm293, %v295, %v291
  %v297 = vmul.f32 1.0, %v296
  %v298 = vmul.f32 %v192, 0.1
  %v299 = vmul.f32 %v207, 0.1
  %v300 = vmul.f32 %v222, 0.1
  %v301 = vmul.f32 %v237, 0.1
  %v302 = vmul.f32 %v252, 0.1
  %v303 = vmul.f32 %v267, 0.1
  %v304 = vmul.f32 %v282, 0.1
  %v305 = vmul.f32 %v297, 0.1
  %v306 = vadd.f32 %v298, 1.0
  %v307 = vadd.f32 %v299, 1.0
  %v308 = vadd.f32 %v300, 1.0
  %v309 = vadd.f32 %v301, 1.0
  %v310 = vadd.f32 %v302, 1.0
  %v311 = vadd.f32 %v303, 1.0
  %v312 = vadd.f32 %v304, 1.0
  %v313 = vadd.f32 %v305, 1.0
  %v314 = vmul.f32 %v19, %v306
  %v315 = vmul.f32 %v20, %v307
  %v316 = vmul.f32 %v21, %v308
  %v317 = vmul.f32 %v22, %v309
  %v318 = vmul.f32 %v23, %v310
  %v319 = vmul.f32 %v24, %v311
  %v320 = vmul.f32 %v25, %v312
  %v321 = vmul.f32 %v26, %v313
  %322 = vst.msk [vmem:[%s4] sm:$0xff] %vm35, %v314
  %323 = vst.msk [vmem:[%s4 + $0x8] sm:$0xff] %vm35, %v315
  %324 = vst.msk [vmem:[%s4 + $0x10] sm:$0xff] %vm35, %v316
  %325 = vst.msk [vmem:[%s4 + $0x18] sm:$0xff] %vm35, %v317
  %326 = vst.msk [vmem:[%s4 + $0x20] sm:$0xff] %vm35, %v318
  %327 = vst.msk [vmem:[%s4 + $0x28] sm:$0xff] %vm35, %v319
  %328 = vst.msk [vmem:[%s4 + $0x30] sm:$0xff] %vm35, %v320
  %329 = vst.msk [vmem:[%s4 + $0x38] sm:$0xff] %vm35, %v321
  %vm330 = vcmask 7168
  %331 = vst.msk [vmem:[%s5] sm:$0xff] %vm330, %v298
  %332 = vst.msk [vmem:[%s5 + $0x8] sm:$0xff] %vm330, %v299
  %333 = vst.msk [vmem:[%s5 + $0x10] sm:$0xff] %vm330, %v300
  %334 = vst.msk [vmem:[%s5 + $0x18] sm:$0xff] %vm330, %v301
  %335 = vst.msk [vmem:[%s5 + $0x20] sm:$0xff] %vm330, %v302
  %336 = vst.msk [vmem:[%s5 + $0x28] sm:$0xff] %vm330, %v303
  %337 = vst.msk [vmem:[%s5 + $0x30] sm:$0xff] %vm330, %v304
  %338 = vst.msk [vmem:[%s5 + $0x38] sm:$0xff] %vm330, %v305
  // Predicated region
  $region18: #{tpu_custom_call.1} parent=0 // pred_check
    _
  $region19: #{tpu_custom_call.1} parent=0 // pred_check_branch
    %340 = sbr.rel (0) target = $region21
  $region20: #{tpu_custom_call.1} parent=0 // pred_region
    _
  $region21: #{tpu_custom_call.1} parent=0 // pred_fallthru
    _
  // Predicated region
  $region22: #{tpu_custom_call.1} parent=0 // pred_check
    _
  $region23: #{tpu_custom_call.1} parent=0 // pred_check_branch
    %342 = sbr.rel (0) target = $region25
  $region24: #{tpu_custom_call.1} parent=0 // pred_region
    _
  $region25: #{tpu_custom_call.1} parent=0 // pred_fallthru
    _
  // Predicated region
  $region26: #{tpu_custom_call.1} parent=0 // pred_check
    _
  $region27: #{tpu_custom_call.1} parent=0 // pred_check_branch
    %344 = sbr.rel (0) target = $region29
  $region28: #{tpu_custom_call.1} parent=0 // pred_region
    _
  $region29: #{tpu_custom_call.1} parent=0 // pred_fallthru
    _
  // Predicated region
  $region30: #{tpu_custom_call.1} parent=0 // pred_check
    _
  $region31: #{tpu_custom_call.1} parent=0 // pred_check_branch
    %346 = sbr.rel (0) target = $region33
  $region32: #{tpu_custom_call.1} parent=0 // pred_region
    _
  $region33: #{tpu_custom_call.1} parent=0 // pred_fallthru
    _

</llo_original>
